<compile_context>
chip_gen: v5e
topology: v5e:2x2
jax: 0.10.0
libtpu: 0.0.40
codegen_flags: <defaults>
</compile_context>

<pallas_src>
import math

import jax
import jax.numpy as jnp
import numpy as np
from jax.experimental import pallas as pl
from jax.experimental.pallas import tpu as pltpu


def _make_kernel(B, C, use_affine_level):
    """Fused noise-MLP (all batches) + feature-wise affine over one lane tile."""

    def kernel(ne_ref, w1t_ref, b1_ref, a_ref, w2_ref, b2_ref, x_ref, o_ref):
        ne = ne_ref[...]          # (nlc, B)  noise embeddings as columns
        w1t = w1t_ref[...]        # (nlc, n_exp)
        b1 = b1_ref[...]          # (1, n_exp)
        alpha = a_ref[...]        # (1, n_exp)
        w2 = w2_ref[...]          # (out_dim, n_exp)  torch layout
        b2 = b2_ref[...]          # (out_dim, 1)

        # Tiny MLP, unrolled over the (static, small) batch. Exact f32, no MXU:
        # the matmuls are broadcast-multiplies + sublane/lane reduces and the
        # result lands as a column on the sublane axis (matches x's row layout).
        gcols, bcols = [], []
        for b in range(B):
            ne_col = ne[:, b:b + 1]                                   # (nlc, 1)
            h = jnp.sum(w1t * ne_col, axis=0, keepdims=True) + b1     # (1, n_exp)
            h = jnp.where(h >= 0.0, h, alpha * h)                     # PReLU
            s = jnp.sum(w2 * h, axis=1, keepdims=True) + b2           # (out_dim, 1)
            if use_affine_level:
                gcols.append(s[:C, :])                                # gamma_b (C,1)
                bcols.append(s[C:, :])                                # beta_b  (C,1)
            else:
                gcols.append(s)                                       # shift_b (C,1)

        def cat(cols):
            return cols[0] if len(cols) == 1 else jnp.concatenate(cols, axis=0)

        x = x_ref[...].astype(jnp.float32)                            # (B*C, tile_hw)
        if use_affine_level:
            out = (1.0 + cat(gcols)) * x + cat(bcols)
        else:
            out = x + cat(gcols)                                      # (B*C,1) over lanes
        o_ref[...] = out.astype(o_ref.dtype)

    return kernel


def _choose_hw_tile(rows, HW, itemsize):
    """Lane-tile width: whole HW for small maps (one grid step, no per-step
    overhead); else the largest 128-multiple divisor of HW keeping one block
    <= ~6 MiB so 4x (double-buffered in+out) stays well inside v7x's 64 MiB VMEM."""
    if HW % 128 != 0:
        return HW                                   # full-extent block is always legal
    max_block_bytes = 6 * 1024 * 1024
    if rows * HW * itemsize <= max_block_bytes:
        return HW
    max_tile = max(128, (max_block_bytes // (rows * itemsize)) // 128 * 128)
    best, t = 128, 256
    while t <= max_tile:
        if HW % t == 0:
            best = t
        t += 128
    return best


def prepare_params(params):
    """One-time re-layout of torch-shaped params into kernel layout
    (done at checkpoint-load time, not per forward)."""
    w1, b1, alpha, w2, b2 = params
    n_exp = w1.shape[0]                      # 4 * noise_level_channels
    out_dim = w2.shape[0]
    return (
        jnp.asarray(w1, jnp.float32).T,                      # (nlc, n_exp)
        jnp.asarray(b1, jnp.float32).reshape(1, n_exp),      # row
        jnp.asarray(alpha, jnp.float32).reshape(1, n_exp),   # row
        jnp.asarray(w2, jnp.float32),                        # (out_dim, n_exp)
        jnp.asarray(b2, jnp.float32).reshape(out_dim, 1),    # column
    )


def feature_wise_affine(x, noise_embed, kparams, use_affine_level=False, inplace=False):
    """Matches FeatureWiseAffine.forward. x: (B, C, H, W) (dtype preserved),
    noise_embed: (B, nlc). `inplace=True` aliases x's buffer for the output
    (only when the caller does not need x afterwards)."""
    w1t, b1r, ar, w2, b2c = kparams
    B, C, H, W = x.shape
    HW = H * W
    rows = B * C
    nlc, n_exp = w1t.shape
    out_dim = w2.shape[0]
    assert out_dim == C * (1 + int(use_affine_level))

    # Free row-major reshape; native dtype I/O (no forced f32 doubling HBM bytes).
    x2 = x.reshape(rows, HW)
    ne_t = noise_embed.astype(jnp.float32).T               # (nlc, B) — tiny

    ebytes = x2.dtype.itemsize
    tile_hw = _choose_hw_tile(rows, HW, ebytes)
    n_steps = HW // tile_hw

    mlp_flops = B * (2 * nlc * n_exp + 2 * n_exp * out_dim)
    flops = int(n_steps * mlp_flops + (3 if use_affine_level else 1) * rows * HW)
    bytes_accessed = int(ebytes * 2 * rows * HW
                         + 4 * (nlc * B + nlc * n_exp + 2 * n_exp
                                + out_dim * n_exp + out_dim))

    extra = {"input_output_aliases": {6: 0}} if inplace else {}

    out = pl.pallas_call(
        _make_kernel(B, C, use_affine_level),
        out_shape=jax.ShapeDtypeStruct((rows, HW), x2.dtype),
        grid=(n_steps,),
        in_specs=[
            pl.BlockSpec((nlc, B), lambda j: (0, 0)),            # noise embeddings (cols)
            pl.BlockSpec((nlc, n_exp), lambda j: (0, 0)),        # W1^T
            pl.BlockSpec((1, n_exp), lambda j: (0, 0)),          # b1
            pl.BlockSpec((1, n_exp), lambda j: (0, 0)),          # PReLU alpha
            pl.BlockSpec((out_dim, n_exp), lambda j: (0, 0)),    # W2 (torch layout)
            pl.BlockSpec((out_dim, 1), lambda j: (0, 0)),        # b2
            pl.BlockSpec((rows, tile_hw), lambda j: (0, j)),     # x, (8k,128m) tiles
        ],
        out_specs=pl.BlockSpec((rows, tile_hw), lambda j: (0, j)),
        compiler_params=pltpu.CompilerParams(
            dimension_semantics=("parallel",),
            vmem_limit_bytes=48 * 1024 * 1024),
        cost_estimate=pl.CostEstimate(flops=flops, transcendentals=0,
                                      bytes_accessed=bytes_accessed),
        **extra,
    )(ne_t, w1t, b1r, ar, w2, b2c, x2)
    return out.reshape(B, C, H, W)


def init_params(key, noise_level_channels, out_channels, use_affine_level):
    """Deterministic synthetic params with torch-equivalent shapes/init."""
    n_exp = noise_level_channels * 4
    out_dim = out_channels * (1 + int(use_affine_level))
    k1, k2, k3, k4, k5 = jax.random.split(key, 5)
    bnd1 = 1.0 / math.sqrt(noise_level_channels)
    w1 = jax.random.uniform(k1, (n_exp, noise_level_channels), jnp.float32, -bnd1, bnd1)
    b1 = jax.random.uniform(k2, (n_exp,), jnp.float32, -bnd1, bnd1)
    alpha = jax.random.uniform(k3, (n_exp,), jnp.float32, 0.05, 0.5)   # PReLU slopes
    bnd2 = 1.0 / math.sqrt(n_exp)
    w2 = jax.random.uniform(k4, (out_dim, n_exp), jnp.float32, -bnd2, bnd2)
    b2 = jax.random.uniform(k5, (out_dim,), jnp.float32, -bnd2, bnd2)
    return (w1, b1, alpha, w2, b2)


def ref_forward(x, noise_embed, params, use_affine_level):
    """Pure-JAX/XLA reference mirroring the PyTorch forward (for validation)."""
    w1, b1, alpha, w2, b2 = params
    h = jnp.dot(noise_embed, w1.T, precision=jax.lax.Precision.HIGHEST) + b1
    h = jnp.where(h >= 0, h, alpha * h)
    s = jnp.dot(h, w2.T, precision=jax.lax.Precision.HIGHEST) + b2     # (B, out_dim)
    C = x.shape[1]
    if use_affine_level:
        gamma = s[:, :C][:, :, None, None]
        beta = s[:, C:][:, :, None, None]
        return (1.0 + gamma) * x + beta
    return x + s[:, :, None, None]


if __name__ == "__main__":
    B, C, H, W = 2, 4, 16, 16
    noise_level_channels = 32

    key = jax.random.PRNGKey(0)
    kx, kn, kp = jax.random.split(key, 3)
    x = jax.random.normal(kx, (B, C, H, W), jnp.float32)                    # NCHW
    noise_embed = jax.random.normal(kn, (B, noise_level_channels), jnp.float32)

    fwd = jax.jit(feature_wise_affine, static_argnums=(3, 4))

    # float32 I/O, both affine modes
    for use_affine in (False, True):
        params = init_params(kp, noise_level_channels, C, use_affine)
        kparams = prepare_params(params)                 # one-time layout prep
        y = jax.block_until_ready(fwd(x, noise_embed, kparams, use_affine, False))
        y_ref = ref_forward(x, noise_embed, params, use_affine)
        assert y.shape == (B, C, H, W) and y.dtype == x.dtype
        np.testing.assert_allclose(np.asarray(y), np.asarray(y_ref),
                                   rtol=1e-4, atol=1e-5)

    # native-dtype I/O: bf16 feature map stays bf16 end-to-end (halved HBM bytes)
    params = init_params(kp, noise_level_channels, C, False)
    kparams = prepare_params(params)
    x_bf = x.astype(jnp.bfloat16)
    y_bf = jax.block_until_ready(fwd(x_bf, noise_embed, kparams, False, False))
    assert y_bf.dtype == jnp.bfloat16
    y_ref_bf = ref_forward(x_bf.astype(jnp.float32), noise_embed, params, False)
    np.testing.assert_allclose(np.asarray(y_bf.astype(jnp.float32)),
                               np.asarray(y_ref_bf), rtol=1e-2, atol=1e-2)

    print("KERNEL_OK")
</pallas_src>

<mosaic_0001>
module attributes {stable_mosaic.version = 11 : i64} {
  func.func @kernel(%arg0: i32, %arg1: memref<32x2xf32, #tpu.memory_space<vmem>>, %arg2: memref<32x128xf32, #tpu.memory_space<vmem>>, %arg3: memref<1x128xf32, #tpu.memory_space<vmem>>, %arg4: memref<1x128xf32, #tpu.memory_space<vmem>>, %arg5: memref<4x128xf32, #tpu.memory_space<vmem>>, %arg6: memref<4x1xf32, #tpu.memory_space<vmem>>, %arg7: memref<8x256xf32, #tpu.memory_space<vmem>>, %arg8: memref<8x256xf32, #tpu.memory_space<vmem>>) attributes {dimension_semantics = [#tpu.dimension_semantics<parallel>], iteration_bounds = array<i64: 1>, scalar_prefetch = 0 : i64, scratch_operands = 0 : i64, tpu.core_type = #tpu.core_type<tc>, window_params = [{pipeline_mode = #tpu.pipeline_mode<synchronous>, transform_indices = @transform_0, window_bounds = array<i64: 32, 2>}, {pipeline_mode = #tpu.pipeline_mode<synchronous>, transform_indices = @transform_1, window_bounds = array<i64: 32, 128>}, {pipeline_mode = #tpu.pipeline_mode<synchronous>, transform_indices = @transform_2, window_bounds = array<i64: 1, 128>}, {pipeline_mode = #tpu.pipeline_mode<synchronous>, transform_indices = @transform_3, window_bounds = array<i64: 1, 128>}, {pipeline_mode = #tpu.pipeline_mode<synchronous>, transform_indices = @transform_4, window_bounds = array<i64: 4, 128>}, {pipeline_mode = #tpu.pipeline_mode<synchronous>, transform_indices = @transform_5, window_bounds = array<i64: 4, 1>}, {transform_indices = @transform_6, window_bounds = array<i64: 8, 256>}, {transform_indices = @transform_7, window_bounds = array<i64: 8, 256>}]} {
    %c0 = arith.constant 0 : index
    %c0_0 = arith.constant 0 : index
    %0 = vector.load %arg1[%c0, %c0_0] : memref<32x2xf32, #tpu.memory_space<vmem>>, vector<32x2xf32>
    %c0_1 = arith.constant 0 : index
    %c0_2 = arith.constant 0 : index
    %1 = vector.load %arg2[%c0_1, %c0_2] : memref<32x128xf32, #tpu.memory_space<vmem>>, vector<32x128xf32>
    %c0_3 = arith.constant 0 : index
    %c0_4 = arith.constant 0 : index
    %2 = vector.load %arg3[%c0_3, %c0_4] : memref<1x128xf32, #tpu.memory_space<vmem>>, vector<1x128xf32>
    %c0_5 = arith.constant 0 : index
    %c0_6 = arith.constant 0 : index
    %3 = vector.load %arg4[%c0_5, %c0_6] : memref<1x128xf32, #tpu.memory_space<vmem>>, vector<1x128xf32>
    %c0_7 = arith.constant 0 : index
    %c0_8 = arith.constant 0 : index
    %4 = vector.load %arg5[%c0_7, %c0_8] : memref<4x128xf32, #tpu.memory_space<vmem>>, vector<4x128xf32>
    %c0_9 = arith.constant 0 : index
    %c0_10 = arith.constant 0 : index
    %5 = vector.load %arg6[%c0_9, %c0_10] : memref<4x1xf32, #tpu.memory_space<vmem>>, vector<4x1xf32>
    %6 = vector.extract_strided_slice %0 {offsets = [0, 0], sizes = [32, 1], strides = [1, 1]} : vector<32x2xf32> to vector<32x1xf32>
    %7 = vector.broadcast %6 : vector<32x1xf32> to vector<32x128xf32>
    %8 = arith.mulf %1, %7 : vector<32x128xf32>
    %cst = arith.constant dense<0.000000e+00> : vector<128xf32>
    %9 = vector.multi_reduction <add>, %8, %cst [0] : vector<32x128xf32> to vector<128xf32>
    %10 = vector.shape_cast %9 : vector<128xf32> to vector<1x128xf32>
    %11 = arith.addf %10, %2 : vector<1x128xf32>
    %cst_11 = arith.constant 0.000000e+00 : f32
    %12 = vector.broadcast %cst_11 : f32 to vector<1x128xf32>
    %13 = arith.cmpf oge, %11, %12 : vector<1x128xf32>
    %14 = arith.mulf %3, %11 : vector<1x128xf32>
    %15 = arith.select %13, %11, %14 : vector<1x128xi1>, vector<1x128xf32>
    %16 = vector.broadcast %15 : vector<1x128xf32> to vector<4x128xf32>
    %17 = arith.mulf %4, %16 : vector<4x128xf32>
    %cst_12 = arith.constant dense<0.000000e+00> : vector<4xf32>
    %18 = vector.multi_reduction <add>, %17, %cst_12 [1] : vector<4x128xf32> to vector<4xf32>
    %19 = vector.shape_cast %18 : vector<4xf32> to vector<4x1xf32>
    %20 = arith.addf %19, %5 : vector<4x1xf32>
    %21 = vector.extract_strided_slice %0 {offsets = [0, 1], sizes = [32, 1], strides = [1, 1]} : vector<32x2xf32> to vector<32x1xf32>
    %22 = vector.broadcast %21 : vector<32x1xf32> to vector<32x128xf32>
    %23 = arith.mulf %1, %22 : vector<32x128xf32>
    %cst_13 = arith.constant dense<0.000000e+00> : vector<128xf32>
    %24 = vector.multi_reduction <add>, %23, %cst_13 [0] : vector<32x128xf32> to vector<128xf32>
    %25 = vector.shape_cast %24 : vector<128xf32> to vector<1x128xf32>
    %26 = arith.addf %25, %2 : vector<1x128xf32>
    %cst_14 = arith.constant 0.000000e+00 : f32
    %27 = vector.broadcast %cst_14 : f32 to vector<1x128xf32>
    %28 = arith.cmpf oge, %26, %27 : vector<1x128xf32>
    %29 = arith.mulf %3, %26 : vector<1x128xf32>
    %30 = arith.select %28, %26, %29 : vector<1x128xi1>, vector<1x128xf32>
    %31 = vector.broadcast %30 : vector<1x128xf32> to vector<4x128xf32>
    %32 = arith.mulf %4, %31 : vector<4x128xf32>
    %cst_15 = arith.constant dense<0.000000e+00> : vector<4xf32>
    %33 = vector.multi_reduction <add>, %32, %cst_15 [1] : vector<4x128xf32> to vector<4xf32>
    %34 = vector.shape_cast %33 : vector<4xf32> to vector<4x1xf32>
    %35 = arith.addf %34, %5 : vector<4x1xf32>
    %c0_16 = arith.constant 0 : index
    %c0_17 = arith.constant 0 : index
    %36 = vector.load %arg7[%c0_16, %c0_17] : memref<8x256xf32, #tpu.memory_space<vmem>>, vector<8x256xf32>
    %37 = tpu.concatenate %20, %35 in 0 : vector<4x1xf32>, vector<4x1xf32> -> vector<8x1xf32>
    %38 = vector.broadcast %37 : vector<8x1xf32> to vector<8x256xf32>
    %39 = arith.addf %36, %38 : vector<8x256xf32>
    %c0_18 = arith.constant 0 : index
    %c0_19 = arith.constant 0 : index
    %40 = vector.load %arg8[%c0_18, %c0_19] : memref<8x256xf32, #tpu.memory_space<vmem>>, vector<8x256xf32>
    tpu.vector_store %arg8[%c0_18, %c0_19], %39 {strides = array<i32>} : memref<8x256xf32, #tpu.memory_space<vmem>>, vector<8x256xf32>,
    return
  }
  func.func @transform_0(%arg0: i32) -> (i32, i32) {
    %c0_i32 = arith.constant 0 : i32
    %c0_i32_0 = arith.constant 0 : i32
    %c0_i32_1 = arith.constant 0 : i32
    return %c0_i32, %c0_i32_0 : i32, i32
  }
  func.func @transform_1(%arg0: i32) -> (i32, i32) {
    %c0_i32 = arith.constant 0 : i32
    %c0_i32_0 = arith.constant 0 : i32
    %c0_i32_1 = arith.constant 0 : i32
    return %c0_i32, %c0_i32_0 : i32, i32
  }
  func.func @transform_2(%arg0: i32) -> (i32, i32) {
    %c0_i32 = arith.constant 0 : i32
    %c0_i32_0 = arith.constant 0 : i32
    %c0_i32_1 = arith.constant 0 : i32
    return %c0_i32, %c0_i32_0 : i32, i32
  }
  func.func @transform_3(%arg0: i32) -> (i32, i32) {
    %c0_i32 = arith.constant 0 : i32
    %c0_i32_0 = arith.constant 0 : i32
    %c0_i32_1 = arith.constant 0 : i32
    return %c0_i32, %c0_i32_0 : i32, i32
  }
  func.func @transform_4(%arg0: i32) -> (i32, i32) {
    %c0_i32 = arith.constant 0 : i32
    %c0_i32_0 = arith.constant 0 : i32
    %c0_i32_1 = arith.constant 0 : i32
    return %c0_i32, %c0_i32_0 : i32, i32
  }
  func.func @transform_5(%arg0: i32) -> (i32, i32) {
    %c0_i32 = arith.constant 0 : i32
    %c0_i32_0 = arith.constant 0 : i32
    %c0_i32_1 = arith.constant 0 : i32
    return %c0_i32, %c0_i32_0 : i32, i32
  }
  func.func @transform_6(%arg0: i32) -> (i32, i32) {
    %c0_i32 = arith.constant 0 : i32
    %c0_i32_0 = arith.constant 0 : i32
    return %c0_i32, %arg0 : i32, i32
  }
  func.func @transform_7(%arg0: i32) -> (i32, i32) {
    %c0_i32 = arith.constant 0 : i32
    %c0_i32_0 = arith.constant 0 : i32
    return %c0_i32, %arg0 : i32, i32
  }
}

</mosaic_0001>

<llo_original>
// kernel: feature_wise_affine.1
$region0: #{feature_wise_affine.1}
  #allocation0 [shape = 'u32[]', space=smem, size = 0x4, offset = 0x4, fixed_abs, tag = 'smem constant byte address 0x4 - core index']
  #allocation1 [shape = 'u32[72,128]{1,0:T(1,128)}', space=vmem, size = 0x9000, scoped, tag = 'internal scratch']
  %s0 = inlined_call_operand.vmem [shape: f32[32,2], index: 0, kind: input, shape index: {}]
  %s1 = inlined_call_operand.vmem [shape: f32[32,128], index: 1, kind: input, shape index: {}]
  %s2 = inlined_call_operand.vmem [shape: f32[1,128], index: 2, kind: input, shape index: {}]
  %s3 = inlined_call_operand.vmem [shape: f32[1,128], index: 3, kind: input, shape index: {}]
  %s4 = inlined_call_operand.vmem [shape: f32[4,128], index: 4, kind: input, shape index: {}]
  %s5 = inlined_call_operand.vmem [shape: f32[4,1], index: 5, kind: input, shape index: {}]
  %s6 = inlined_call_operand.vmem [shape: f32[8,256], index: 6, kind: input, shape index: {}]
  %s7 = inlined_call_operand.vmem [shape: f32[8,256], index: 7, kind: output, shape index: {}]
  %s8 = sld [smem:[#allocation0]]
  $region38: #{feature_wise_affine.1} parent=0
    _
  %s10 = ssub.s32 1, %s8
  %s11 = scalar_select 0, %s10, %s8
  // Predicated region
  $region2: #{feature_wise_affine.1} parent=0 // pred_check
    _
  $region3: #{feature_wise_affine.1} parent=0 // pred_check_branch
    %13 = sbr.rel (0) target = $region5
  $region4: #{feature_wise_affine.1} parent=0 // pred_region
    _
  $region5: #{feature_wise_affine.1} parent=0 // pred_fallthru
    _
  // Predicated region
  $region6: #{feature_wise_affine.1} parent=0 // pred_check
    _
  $region7: #{feature_wise_affine.1} parent=0 // pred_check_branch
    %15 = sbr.rel (0) target = $region9
  $region8: #{feature_wise_affine.1} parent=0 // pred_region
    _
  $region9: #{feature_wise_affine.1} parent=0 // pred_fallthru
    _
  // Predicated region
  $region10: #{feature_wise_affine.1} parent=0 // pred_check
    _
  $region11: #{feature_wise_affine.1} parent=0 // pred_check_branch
    %17 = sbr.rel (0) target = $region13
  $region12: #{feature_wise_affine.1} parent=0 // pred_region
    _
  $region13: #{feature_wise_affine.1} parent=0 // pred_fallthru
    _
  // Predicated region
  $region14: #{feature_wise_affine.1} parent=0 // pred_check
    _
  $region15: #{feature_wise_affine.1} parent=0 // pred_check_branch
    %19 = sbr.rel (0) target = $region17
  $region16: #{feature_wise_affine.1} parent=0 // pred_region
    _
  $region17: #{feature_wise_affine.1} parent=0 // pred_fallthru
    _
  // Predicated region
  $region18: #{feature_wise_affine.1} parent=0 // pred_check
    _
  $region19: #{feature_wise_affine.1} parent=0 // pred_check_branch
    %21 = sbr.rel (0) target = $region21
  $region20: #{feature_wise_affine.1} parent=0 // pred_region
    _
  $region21: #{feature_wise_affine.1} parent=0 // pred_fallthru
    _
  // Predicated region
  $region22: #{feature_wise_affine.1} parent=0 // pred_check
    _
  $region23: #{feature_wise_affine.1} parent=0 // pred_check_branch
    %23 = sbr.rel (0) target = $region25
  $region24: #{feature_wise_affine.1} parent=0 // pred_region
    _
  $region25: #{feature_wise_affine.1} parent=0 // pred_fallthru
    _
  // Predicated region
  $region26: #{feature_wise_affine.1} parent=0 // pred_check
    _
  $region27: #{feature_wise_affine.1} parent=0 // pred_check_branch
    %25 = sbr.rel (0) target = $region29
  $region28: #{feature_wise_affine.1} parent=0 // pred_region
    _
  $region29: #{feature_wise_affine.1} parent=0 // pred_fallthru
    _
  %v26 = vld [vmem:[%s0] sm:$0xff]
  %v27 = vld [vmem:[%s0 + $0x8] sm:$0xff]
  %v28 = vld [vmem:[%s0 + $0x10] sm:$0xff]
  %v29 = vld [vmem:[%s0 + $0x18] sm:$0xff]
  %v30 = vld [vmem:[%s1] sm:$0xff]
  %v31 = vld [vmem:[%s1 + $0x8] sm:$0xff]
  %v32 = vld [vmem:[%s1 + $0x10] sm:$0xff]
  %v33 = vld [vmem:[%s1 + $0x18] sm:$0xff]
  %v34 = vld [vmem:[%s2] sm:$0x1]
  %v35 = vld [vmem:[%s3] sm:$0x1]
  %v36 = vld [vmem:[%s4] sm:$0xf]
  %v37 = vld [vmem:[%s5] sm:$0xf]
  %39 = vset.pattern.permute.xlu0 0
  %40 = vperm.xlu0 %39, %v26
  %v41 = vpop.permute.xlu0 %40
  %44 = vset.pattern.permute.xlu0 0
  %45 = vperm.xlu0 %44, %v27
  %v46 = vpop.permute.xlu0 %45
  %49 = vset.pattern.permute.xlu0 0
  %50 = vperm.xlu0 %49, %v28
  %v51 = vpop.permute.xlu0 %50
  %54 = vset.pattern.permute.xlu0 0
  %55 = vperm.xlu0 %54, %v29
  %v56 = vpop.permute.xlu0 %55
  %v58 = vmul.f32 %v30, %v41
  %v59 = vmul.f32 %v31, %v46
  %v60 = vmul.f32 %v32, %v51
  %v61 = vmul.f32 %v33, %v56
  %v62 = vadd.f32 %v58, %v59
  %v63 = vadd.f32 %v62, %v60
  %v64 = vadd.f32 %v63, %v61
  %v65 = vrot.slane %v64, 4
  %v66 = vadd.f32 %v64, %v65
  %v67 = vrot.slane %v66, 2
  %v68 = vadd.f32 %v66, %v67
  %v69 = vrot.slane %v68, 1
  %v70 = vadd.f32 %v68, %v69
  %v71 = vadd.f32 %v70, %v34
  %vm72 = vcmp.ge.f32.partialorder %v71, 0.0
  %v73 = vmul.f32 %v35, %v71
  %v74 = vsel %vm72, %v71, %v73
  %v75 = vperm.slane %v74, 0
  %v76 = vmul.f32 %v36, %v75
  %vm77 = vcmask 1043456
  %v78 = vsel %vm77, %v76, 0.0
  %79 = vadd.xlane.f32.xlu0 %v78
  %v80 = vpop.xlane.xlu0 %79
  %v81 = vadd.f32 %v80, %v37
  %82 = vset.pattern.permute.xlu0 1
  %83 = vperm.xlu0 %82, %v26
  %v84 = vpop.permute.xlu0 %83
  %86 = vset.pattern.permute.xlu0 1
  %87 = vperm.xlu0 %86, %v27
  %v88 = vpop.permute.xlu0 %87
  %90 = vset.pattern.permute.xlu0 1
  %91 = vperm.xlu0 %90, %v28
  %v92 = vpop.permute.xlu0 %91
  %94 = vset.pattern.permute.xlu0 1
  %95 = vperm.xlu0 %94, %v29
  %v96 = vpop.permute.xlu0 %95
  %v98 = vmul.f32 %v30, %v84
  %v99 = vmul.f32 %v31, %v88
  %v100 = vmul.f32 %v32, %v92
  %v101 = vmul.f32 %v33, %v96
  %v102 = vadd.f32 %v98, %v99
  %v103 = vadd.f32 %v102, %v100
  %v104 = vadd.f32 %v103, %v101
  %v105 = vrot.slane %v104, 4
  %v106 = vadd.f32 %v104, %v105
  %v107 = vrot.slane %v106, 2
  %v108 = vadd.f32 %v106, %v107
  %v109 = vrot.slane %v108, 1
  %v110 = vadd.f32 %v108, %v109
  %v111 = vadd.f32 %v110, %v34
  %vm112 = vcmp.ge.f32.partialorder %v111, 0.0
  %v113 = vmul.f32 %v35, %v111
  %v114 = vsel %vm112, %v111, %v113
  %v115 = vperm.slane %v114, 0
  %v116 = vmul.f32 %v36, %v115
  %v117 = vsel %vm77, %v116, 0.0
  %118 = vadd.xlane.f32.xlu0 %v117
  %v119 = vpop.xlane.xlu0 %118
  %v120 = vadd.f32 %v119, %v37
  %v121 = vld [vmem:[%s6] sm:$0xff]
  %v122 = vld [vmem:[%s6 + $0x8] sm:$0xff]
  %v124 = vrot.slane %v120, 4
  %v126 = vsel %vm77, %v81, %v124
  %128 = vset.pattern.permute.xlu0 0
  %129 = vperm.xlu0 %128, %v126
  %v130 = vpop.permute.xlu0 %129
  %v132 = vadd.f32 %v121, %v130
  %v133 = vadd.f32 %v122, %v130
  %134 = vst [vmem:[%s7] sm:$0xff] %v132
  %135 = vst [vmem:[%s7 + $0x8] sm:$0xff] %v133
  // Predicated region
  $region30: #{feature_wise_affine.1} parent=0 // pred_check
    _
  $region31: #{feature_wise_affine.1} parent=0 // pred_check_branch
    %137 = sbr.rel (0) target = $region33
  $region32: #{feature_wise_affine.1} parent=0 // pred_region
    _
  $region33: #{feature_wise_affine.1} parent=0 // pred_fallthru
    _
  // Predicated region
  $region34: #{feature_wise_affine.1} parent=0 // pred_check
    _
  $region35: #{feature_wise_affine.1} parent=0 // pred_check_branch
    %139 = sbr.rel (0) target = $region37
  $region36: #{feature_wise_affine.1} parent=0 // pred_region
    _
  $region37: #{feature_wise_affine.1} parent=0 // pred_fallthru
    _

</llo_original>
